<compile_context>
chip_gen: v5e
topology: v5e:2x2
jax: 0.10.0
libtpu: 0.0.40
codegen_flags: <defaults>
</compile_context>

<pallas_src>
import functools

import jax
import jax.numpy as jnp
from jax.experimental import pallas as pl
from jax.experimental.pallas import tpu as pltpu


def _round_up(x, m):
    return ((x + m - 1) // m) * m


def _pick_tile(dim, prefs=(512, 256, 128)):
    for t in prefs:
        if dim % t == 0:
            return t
    return dim  # dims here are always multiples of 128


# ---------------------------------------------------------------------------
# Pallas kernel: tiled   out = act(M @ XW + b)
#   grid = (Rp/TM, Cp/TN, Kp/TK); k (last axis) is the contraction axis.
#   acc_ref: persistent f32 VMEM accumulator for the current (i, j) tile.
# ---------------------------------------------------------------------------
def _mm_bias_act_kernel(*refs, act):
    if act == "prelu":
        m_ref, xw_ref, b_ref, alpha_ref, o_ref, acc_ref = refs
    else:
        m_ref, xw_ref, b_ref, o_ref, acc_ref = refs
        alpha_ref = None

    @pl.when(pl.program_id(2) == 0)
    def _init():
        acc_ref[...] = jnp.zeros_like(acc_ref)

    acc_ref[...] += jnp.dot(m_ref[...], xw_ref[...],
                            preferred_element_type=jnp.float32)

    @pl.when(pl.program_id(2) == pl.num_programs(2) - 1)
    def _finalize():
        y = acc_ref[...] + b_ref[...]
        if act == "relu":
            y = jnp.maximum(y, 0.0)
        elif act == "prelu":
            a = alpha_ref[0]
            y = jnp.where(y > 0.0, y, a * y)
        o_ref[...] = y.astype(o_ref.dtype)


def fused_mm_bias_act(m_pad, xw_pad, b_pad, alpha, *, act, out_rows, out_cols):
    """M_pad [Rp,Kp] bf16, XW_pad [Kp,Cp] bf16, b_pad [1,Cp] f32 -> f32 [rows,cols]."""
    Rp, Kp = m_pad.shape
    Kp2, Cp = xw_pad.shape
    assert Kp == Kp2
    TM, TK = _pick_tile(Rp), _pick_tile(Kp)
    TN = _pick_tile(Cp, (256, 128))
    grid = (Rp // TM, Cp // TN, Kp // TK)

    in_specs = [
        pl.BlockSpec((TM, TK), lambda i, j, k: (i, k)),
        pl.BlockSpec((TK, TN), lambda i, j, k: (k, j)),
        pl.BlockSpec((1, TN), lambda i, j, k: (0, j)),
    ]
    inputs = [m_pad, xw_pad, b_pad]
    if act == "prelu":
        in_specs.append(pl.BlockSpec(memory_space=pltpu.MemorySpace.SMEM))
        inputs.append(alpha.astype(jnp.float32).reshape(1))

    out = pl.pallas_call(
        functools.partial(_mm_bias_act_kernel, act=act),
        out_shape=jax.ShapeDtypeStruct((Rp, Cp), jnp.float32),
        grid_spec=pltpu.PrefetchScalarGridSpec(
            num_scalar_prefetch=0,
            grid=grid,
            in_specs=in_specs,
            out_specs=pl.BlockSpec((TM, TN), lambda i, j, k: (i, j)),
            scratch_shapes=[pltpu.VMEM((TM, TN), jnp.float32)],
        ),
        compiler_params=pltpu.CompilerParams(
            dimension_semantics=("parallel", "parallel", "arbitrary"),
            vmem_limit_bytes=32 * 1024 * 1024),
    )(*inputs)
    return out[:out_rows, :out_cols]


def gnn_layer(m_pad, x, w, b, alpha, *, act, rows):
    """One message-passing layer: act(M @ (X @ W) + b), sliced to true shape."""
    Kp = m_pad.shape[1]
    C = w.shape[1]
    Cp = _round_up(C, 128)
    # Small projection (contraction dim 8..32) done once in XLA, not per M-tile.
    xw = jnp.dot(x.astype(jnp.float32), w, preferred_element_type=jnp.float32)
    xw_pad = jnp.zeros((Kp, Cp), jnp.bfloat16).at[:xw.shape[0], :C].set(
        xw.astype(jnp.bfloat16))
    b_pad = jnp.zeros((1, Cp), jnp.float32).at[0, :C].set(b)
    return fused_mm_bias_act(m_pad, xw_pad, b_pad, alpha,
                             act=act, out_rows=rows, out_cols=C)


# ---------------------------------------------------------------------------
# Host-side glue: densify graph / hypergraph structure (built ONCE per forward)
# ---------------------------------------------------------------------------
def gcn_norm_adj(edge_index, num_nodes):
    """D^{-1/2} (A + I) D^{-1/2}; duplicate edges accumulate (scatter-add)."""
    src, dst = edge_index
    A = jnp.zeros((num_nodes, num_nodes), jnp.float32).at[dst, src].add(1.0)
    # TODO(synk): PyG gcn_norm uses add_remaining_self_loops; plain +I used here.
    A = A + jnp.eye(num_nodes, dtype=jnp.float32)
    deg = A.sum(axis=1)
    dinv = jnp.where(deg > 0, 1.0 / jnp.sqrt(deg), 0.0)
    return dinv[:, None] * A * dinv[None, :]


def hyper_mats(hyperedge_index, num_nodes, num_edges):
    """Mean-aggregation operators: Mv [N,E] (edge->node), Mn [E,N] (node->edge)."""
    node, edge = hyperedge_index
    H = jnp.zeros((num_nodes, num_edges), jnp.float32).at[node, edge].add(1.0)
    d_v = jnp.clip(H.sum(axis=1), 1.0)
    d_e = jnp.clip(H.sum(axis=0), 1.0)
    Mv = H / d_v[:, None]
    Mn = (H / d_e[None, :]).T
    return Mv, Mn


def _pad_bf16(m, rows, cols):
    out = jnp.zeros((rows, cols), jnp.bfloat16)
    return out.at[:m.shape[0], :m.shape[1]].set(m.astype(jnp.bfloat16))


# ---------------------------------------------------------------------------
# Parameter init (deterministic, Glorot like PyTorch defaults)
# ---------------------------------------------------------------------------
def glorot(key, shape):
    fan_in, fan_out = shape
    limit = jnp.sqrt(6.0 / (fan_in + fan_out))
    return jax.random.uniform(key, shape, jnp.float32, -limit, limit)


def init_params(key, in_dim, hedge_dim, hnode_dim, node_dim, n_layers):
    keys = jax.random.split(key, 2 + 2 * n_layers)
    p = {"prelu_alpha": jnp.full((1,), 0.25, jnp.float32)}  # nn.PReLU default
    # GraphEncoder: GCN(in_dim -> 2*node_dim) -> GCN(2*node_dim -> node_dim)
    p["gcn1_w"] = glorot(keys[0], (in_dim, 2 * node_dim))
    p["gcn1_b"] = jnp.zeros((2 * node_dim,), jnp.float32)
    p["gcn2_w"] = glorot(keys[1], (2 * node_dim, node_dim))
    p["gcn2_b"] = jnp.zeros((node_dim,), jnp.float32)
    # HypergraphEncoder: n_layers x Hypergraph_conv
    ki, in_c = 2, in_dim
    for l in range(n_layers):
        p[f"hconv{l}_we"] = glorot(keys[ki], (in_c, hedge_dim)); ki += 1
        p[f"hconv{l}_be"] = jnp.zeros((hedge_dim,), jnp.float32)
        p[f"hconv{l}_wv"] = glorot(keys[ki], (hedge_dim, hnode_dim)); ki += 1
        p[f"hconv{l}_bv"] = jnp.zeros((hnode_dim,), jnp.float32)
        in_c = hnode_dim
    return p


# ---------------------------------------------------------------------------
# HyperRegionCL.forward
# ---------------------------------------------------------------------------
def hyper_region_cl_forward(params, x_n, x_hn, edge_index, hyperedge_index,
                            num_nodes, num_edges, n_layers):
    Np = _round_up(num_nodes, 128)
    e_tot = num_edges + num_nodes
    Ep = _round_up(e_tot, 128)

    # ---- densify + normalize operators once (bf16, lane-dense padded) ----
    A_pad = _pad_bf16(gcn_norm_adj(edge_index, num_nodes), Np, Np)

    node_idx = jnp.arange(num_nodes, dtype=jnp.int32)
    edge_idx = jnp.arange(num_edges, e_tot, dtype=jnp.int32)
    hidx = jnp.concatenate(
        [hyperedge_index, jnp.stack([node_idx, edge_idx])], axis=1)
    Mv, Mn = hyper_mats(hidx, num_nodes, e_tot)
    Mv_pad = _pad_bf16(Mv, Np, Ep)
    Mn_pad = _pad_bf16(Mn, Ep, Np)

    alpha = params["prelu_alpha"]

    # ---- GraphEncoder(x_n, edge_index) ----
    h = gnn_layer(A_pad, x_n, params["gcn1_w"], params["gcn1_b"], alpha,
                  act="relu", rows=num_nodes)
    # TODO(synk): F.dropout(p=0.2) is stochastic; inference (identity) used here.
    n = gnn_layer(A_pad, h, params["gcn2_w"], params["gcn2_b"], alpha,
                  act="none", rows=num_nodes)

    # ---- HypergraphEncoder(x_hn, hyperedge_index + self-loops) ----
    # TODO(synk): Hypergraph_conv source not provided; standard two-stage
    # (node->edge, edge->node) mean aggregation with linear projections is
    # used, with PReLU on the node output as in HypergraphEncoder.
    x, e = x_hn, None
    for l in range(n_layers):
        e = gnn_layer(Mn_pad, x, params[f"hconv{l}_we"], params[f"hconv{l}_be"],
                      alpha, act="none", rows=e_tot)
        x = gnn_layer(Mv_pad, e, params[f"hconv{l}_wv"], params[f"hconv{l}_bv"],
                      alpha, act="prelu", rows=num_nodes)
        # TODO(synk): inter-layer dropout skipped (inference semantics).
    return n, x, e[:num_edges]


# ---------------------------------------------------------------------------
if __name__ == "__main__":
    key = jax.random.PRNGKey(0)
    in_dim, hedge_dim, hnode_dim, node_dim, proj_dim, n_layers = 8, 16, 16, 16, 32, 2
    num_nodes, num_edges = 16, 6

    k1, k2, k3, k4, kp = jax.random.split(key, 5)
    x_n = jax.random.normal(k1, (num_nodes, in_dim), jnp.float32)
    x_hn = jax.random.normal(k2, (num_nodes, in_dim), jnp.float32)

    # undirected graph edges (both directions)
    src = jax.random.randint(k3, (20,), 0, num_nodes)
    dst = jax.random.randint(jax.random.fold_in(k3, 1), (20,), 0, num_nodes)
    edge_index = jnp.concatenate(
        [jnp.stack([src, dst]), jnp.stack([dst, src])], axis=1).astype(jnp.int32)

    # hypergraph memberships (node, hyperedge) pairs
    hnode_ids = jax.random.randint(k4, (24,), 0, num_nodes)
    hedge_ids = jax.random.randint(jax.random.fold_in(k4, 1), (24,), 0, num_edges)
    hyperedge_index = jnp.stack([hnode_ids, hedge_ids]).astype(jnp.int32)

    params = init_params(kp, in_dim, hedge_dim, hnode_dim, node_dim, n_layers)

    forward = jax.jit(hyper_region_cl_forward,
                      static_argnames=("num_nodes", "num_edges", "n_layers"))
    n, hn, he = forward(params, x_n, x_hn, edge_index, hyperedge_index,
                        num_nodes=num_nodes, num_edges=num_edges,
                        n_layers=n_layers)
    jax.block_until_ready((n, hn, he))

    assert n.shape == (num_nodes, node_dim)
    assert hn.shape == (num_nodes, hnode_dim)
    assert he.shape == (num_edges, hedge_dim)
    assert jnp.all(jnp.isfinite(n)) and jnp.all(jnp.isfinite(hn)) and jnp.all(jnp.isfinite(he))
    print("KERNEL_OK")
</pallas_src>

<mosaic_0001>
module attributes {stable_mosaic.version = 11 : i64} {
  func.func @_mm_bias_act_kernel(%arg0: i32, %arg1: i32, %arg2: i32, %arg3: memref<128x128xbf16, #tpu.memory_space<vmem>>, %arg4: memref<128x128xbf16, #tpu.memory_space<vmem>>, %arg5: memref<1x128xf32, #tpu.memory_space<vmem>>, %arg6: memref<128x128xf32, #tpu.memory_space<vmem>>, %arg7: memref<128x128xf32, #tpu.memory_space<vmem>>) attributes {dimension_semantics = [#tpu.dimension_semantics<parallel>, #tpu.dimension_semantics<parallel>, #tpu.dimension_semantics<arbitrary>], iteration_bounds = array<i64: 1, 1, 1>, scalar_prefetch = 0 : i64, scratch_operands = 1 : i64, tpu.core_type = #tpu.core_type<tc>, window_params = [{transform_indices = @transform_0, window_bounds = array<i64: 128, 128>}, {transform_indices = @transform_1, window_bounds = array<i64: 128, 128>}, {transform_indices = @transform_2, window_bounds = array<i64: 1, 128>}, {transform_indices = @transform_3, window_bounds = array<i64: 128, 128>}]} {
    %c0_i32 = arith.constant 0 : i32
    %0 = arith.cmpi eq, %arg2, %c0_i32 : i32
    %1 = arith.extui %0 : i1 to i32
    %c0_i32_0 = arith.constant 0 : i32
    %2 = arith.cmpi ne, %1, %c0_i32_0 : i32
    scf.if %2 {
      %cst_10 = arith.constant 0.000000e+00 : f32
      %12 = vector.broadcast %cst_10 : f32 to vector<128x128xf32>
      %c0_11 = arith.constant 0 : index
      %c0_12 = arith.constant 0 : index
      %13 = vector.load %arg7[%c0_11, %c0_12] : memref<128x128xf32, #tpu.memory_space<vmem>>, vector<128x128xf32>
      tpu.vector_store %arg7[%c0_11, %c0_12], %12 {strides = array<i32>} : memref<128x128xf32, #tpu.memory_space<vmem>>, vector<128x128xf32>,
    } else {
    }
    %c0 = arith.constant 0 : index
    %c0_1 = arith.constant 0 : index
    %3 = vector.load %arg7[%c0, %c0_1] : memref<128x128xf32, #tpu.memory_space<vmem>>, vector<128x128xf32>
    %c0_2 = arith.constant 0 : index
    %c0_3 = arith.constant 0 : index
    %4 = vector.load %arg3[%c0_2, %c0_3] : memref<128x128xbf16, #tpu.memory_space<vmem>>, vector<128x128xbf16>
    %c0_4 = arith.constant 0 : index
    %c0_5 = arith.constant 0 : index
    %5 = vector.load %arg4[%c0_4, %c0_5] : memref<128x128xbf16, #tpu.memory_space<vmem>>, vector<128x128xbf16>
    %cst = arith.constant dense<0.000000e+00> : vector<128x128xf32>
    %6 = tpu.matmul %4, %5, %cst {dimension_numbers = #tpu.dot_dimension_numbers<[1], [0], [0], [1], [0, 0, 1, 1], [], []>} : vector<128x128xbf16>, vector<128x128xbf16>, vector<128x128xf32> -> vector<128x128xf32>
    %7 = arith.addf %3, %6 : vector<128x128xf32>
    %c0_6 = arith.constant 0 : index
    %c0_7 = arith.constant 0 : index
    %8 = vector.load %arg7[%c0_6, %c0_7] : memref<128x128xf32, #tpu.memory_space<vmem>>, vector<128x128xf32>
    tpu.vector_store %arg7[%c0_6, %c0_7], %7 {strides = array<i32>} : memref<128x128xf32, #tpu.memory_space<vmem>>, vector<128x128xf32>,
    %c0_i32_8 = arith.constant 0 : i32
    %9 = arith.cmpi eq, %arg2, %c0_i32_8 : i32
    %10 = arith.extui %9 : i1 to i32
    %c0_i32_9 = arith.constant 0 : i32
    %11 = arith.cmpi ne, %10, %c0_i32_9 : i32
    scf.if %11 {
      %c0_10 = arith.constant 0 : index
      %c0_11 = arith.constant 0 : index
      %12 = vector.load %arg7[%c0_10, %c0_11] : memref<128x128xf32, #tpu.memory_space<vmem>>, vector<128x128xf32>
      %c0_12 = arith.constant 0 : index
      %c0_13 = arith.constant 0 : index
      %13 = vector.load %arg5[%c0_12, %c0_13] : memref<1x128xf32, #tpu.memory_space<vmem>>, vector<1x128xf32>
      %14 = vector.broadcast %13 : vector<1x128xf32> to vector<128x128xf32>
      %15 = arith.addf %12, %14 : vector<128x128xf32>
      %c0_14 = arith.constant 0 : index
      %c0_15 = arith.constant 0 : index
      %16 = vector.load %arg6[%c0_14, %c0_15] : memref<128x128xf32, #tpu.memory_space<vmem>>, vector<128x128xf32>
      tpu.vector_store %arg6[%c0_14, %c0_15], %15 {strides = array<i32>} : memref<128x128xf32, #tpu.memory_space<vmem>>, vector<128x128xf32>,
    } else {
    }
    return
  }
  func.func @transform_0(%arg0: i32, %arg1: i32, %arg2: i32) -> (i32, i32) {
    %c0_i32 = arith.constant 0 : i32
    return %arg0, %arg2 : i32, i32
  }
  func.func @transform_1(%arg0: i32, %arg1: i32, %arg2: i32) -> (i32, i32) {
    %c0_i32 = arith.constant 0 : i32
    return %arg2, %arg1 : i32, i32
  }
  func.func @transform_2(%arg0: i32, %arg1: i32, %arg2: i32) -> (i32, i32) {
    %c0_i32 = arith.constant 0 : i32
    %c0_i32_0 = arith.constant 0 : i32
    return %c0_i32, %arg1 : i32, i32
  }
  func.func @transform_3(%arg0: i32, %arg1: i32, %arg2: i32) -> (i32, i32) {
    %c0_i32 = arith.constant 0 : i32
    return %arg0, %arg1 : i32, i32
  }
}

module attributes {stable_mosaic.version = 11 : i64} {
  func.func @_mm_bias_act_kernel(%arg0: i32, %arg1: i32, %arg2: i32, %arg3: memref<128x128xbf16, #tpu.memory_space<vmem>>, %arg4: memref<128x128xbf16, #tpu.memory_space<vmem>>, %arg5: memref<1x128xf32, #tpu.memory_space<vmem>>, %arg6: memref<1xf32, #tpu.memory_space<smem>>, %arg7: memref<128x128xf32, #tpu.memory_space<vmem>>, %arg8: memref<128x128xf32, #tpu.memory_space<vmem>>) attributes {dimension_semantics = [#tpu.dimension_semantics<parallel>, #tpu.dimension_semantics<parallel>, #tpu.dimension_semantics<arbitrary>], iteration_bounds = array<i64: 1, 1, 1>, scalar_prefetch = 0 : i64, scratch_operands = 1 : i64, tpu.core_type = #tpu.core_type<tc>, window_params = [{transform_indices = @transform_0, window_bounds = array<i64: 128, 128>}, {transform_indices = @transform_1, window_bounds = array<i64: 128, 128>}, {transform_indices = @transform_2, window_bounds = array<i64: 1, 128>}, {transform_indices = @transform_3, window_bounds = array<i64: 1>}, {transform_indices = @transform_4, window_bounds = array<i64: 128, 128>}]} {
    %c0_i32 = arith.constant 0 : i32
    %0 = arith.cmpi eq, %arg2, %c0_i32 : i32
    %1 = arith.extui %0 : i1 to i32
    %c0_i32_0 = arith.constant 0 : i32
    %2 = arith.cmpi ne, %1, %c0_i32_0 : i32
    scf.if %2 {
      %cst_10 = arith.constant 0.000000e+00 : f32
      %12 = vector.broadcast %cst_10 : f32 to vector<128x128xf32>
      %c0_11 = arith.constant 0 : index
      %c0_12 = arith.constant 0 : index
      %13 = vector.load %arg8[%c0_11, %c0_12] : memref<128x128xf32, #tpu.memory_space<vmem>>, vector<128x128xf32>
      tpu.vector_store %arg8[%c0_11, %c0_12], %12 {strides = array<i32>} : memref<128x128xf32, #tpu.memory_space<vmem>>, vector<128x128xf32>,
    } else {
    }
    %c0 = arith.constant 0 : index
    %c0_1 = arith.constant 0 : index
    %3 = vector.load %arg8[%c0, %c0_1] : memref<128x128xf32, #tpu.memory_space<vmem>>, vector<128x128xf32>
    %c0_2 = arith.constant 0 : index
    %c0_3 = arith.constant 0 : index
    %4 = vector.load %arg3[%c0_2, %c0_3] : memref<128x128xbf16, #tpu.memory_space<vmem>>, vector<128x128xbf16>
    %c0_4 = arith.constant 0 : index
    %c0_5 = arith.constant 0 : index
    %5 = vector.load %arg4[%c0_4, %c0_5] : memref<128x128xbf16, #tpu.memory_space<vmem>>, vector<128x128xbf16>
    %cst = arith.constant dense<0.000000e+00> : vector<128x128xf32>
    %6 = tpu.matmul %4, %5, %cst {dimension_numbers = #tpu.dot_dimension_numbers<[1], [0], [0], [1], [0, 0, 1, 1], [], []>} : vector<128x128xbf16>, vector<128x128xbf16>, vector<128x128xf32> -> vector<128x128xf32>
    %7 = arith.addf %3, %6 : vector<128x128xf32>
    %c0_6 = arith.constant 0 : index
    %c0_7 = arith.constant 0 : index
    %8 = vector.load %arg8[%c0_6, %c0_7] : memref<128x128xf32, #tpu.memory_space<vmem>>, vector<128x128xf32>
    tpu.vector_store %arg8[%c0_6, %c0_7], %7 {strides = array<i32>} : memref<128x128xf32, #tpu.memory_space<vmem>>, vector<128x128xf32>,
    %c0_i32_8 = arith.constant 0 : i32
    %9 = arith.cmpi eq, %arg2, %c0_i32_8 : i32
    %10 = arith.extui %9 : i1 to i32
    %c0_i32_9 = arith.constant 0 : i32
    %11 = arith.cmpi ne, %10, %c0_i32_9 : i32
    scf.if %11 {
      %c0_10 = arith.constant 0 : index
      %c0_11 = arith.constant 0 : index
      %12 = vector.load %arg8[%c0_10, %c0_11] : memref<128x128xf32, #tpu.memory_space<vmem>>, vector<128x128xf32>
      %c0_12 = arith.constant 0 : index
      %c0_13 = arith.constant 0 : index
      %13 = vector.load %arg5[%c0_12, %c0_13] : memref<1x128xf32, #tpu.memory_space<vmem>>, vector<1x128xf32>
      %14 = vector.broadcast %13 : vector<1x128xf32> to vector<128x128xf32>
      %15 = arith.addf %12, %14 : vector<128x128xf32>
      %c0_14 = arith.constant 0 : index
      %16 = memref.load %arg6[%c0_14] : memref<1xf32, #tpu.memory_space<smem>>
      %cst_15 = arith.constant 0.000000e+00 : f32
      %17 = vector.broadcast %cst_15 : f32 to vector<128x128xf32>
      %18 = arith.cmpf ogt, %15, %17 : vector<128x128xf32>
      %19 = vector.broadcast %16 : f32 to vector<128x128xf32>
      %20 = arith.mulf %19, %15 : vector<128x128xf32>
      %21 = arith.select %18, %15, %20 : vector<128x128xi1>, vector<128x128xf32>
      %c0_16 = arith.constant 0 : index
      %c0_17 = arith.constant 0 : index
      %22 = vector.load %arg7[%c0_16, %c0_17] : memref<128x128xf32, #tpu.memory_space<vmem>>, vector<128x128xf32>
      tpu.vector_store %arg7[%c0_16, %c0_17], %21 {strides = array<i32>} : memref<128x128xf32, #tpu.memory_space<vmem>>, vector<128x128xf32>,
    } else {
    }
    return
  }
  func.func @transform_0(%arg0: i32, %arg1: i32, %arg2: i32) -> (i32, i32) {
    %c0_i32 = arith.constant 0 : i32
    return %arg0, %arg2 : i32, i32
  }
  func.func @transform_1(%arg0: i32, %arg1: i32, %arg2: i32) -> (i32, i32) {
    %c0_i32 = arith.constant 0 : i32
    return %arg2, %arg1 : i32, i32
  }
  func.func @transform_2(%arg0: i32, %arg1: i32, %arg2: i32) -> (i32, i32) {
    %c0_i32 = arith.constant 0 : i32
    %c0_i32_0 = arith.constant 0 : i32
    return %c0_i32, %arg1 : i32, i32
  }
  func.func @transform_3(%arg0: i32, %arg1: i32, %arg2: i32) -> i32 {
    %c0_i32 = arith.constant 0 : i32
    %c0_i32_0 = arith.constant 0 : i32
    return %c0_i32 : i32
  }
  func.func @transform_4(%arg0: i32, %arg1: i32, %arg2: i32) -> (i32, i32) {
    %c0_i32 = arith.constant 0 : i32
    return %arg0, %arg1 : i32, i32
  }
}

module attributes {stable_mosaic.version = 11 : i64} {
  func.func @_mm_bias_act_kernel(%arg0: i32, %arg1: i32, %arg2: i32, %arg3: memref<128x128xbf16, #tpu.memory_space<vmem>>, %arg4: memref<128x128xbf16, #tpu.memory_space<vmem>>, %arg5: memref<1x128xf32, #tpu.memory_space<vmem>>, %arg6: memref<128x128xf32, #tpu.memory_space<vmem>>, %arg7: memref<128x128xf32, #tpu.memory_space<vmem>>) attributes {dimension_semantics = [#tpu.dimension_semantics<parallel>, #tpu.dimension_semantics<parallel>, #tpu.dimension_semantics<arbitrary>], iteration_bounds = array<i64: 1, 1, 1>, scalar_prefetch = 0 : i64, scratch_operands = 1 : i64, tpu.core_type = #tpu.core_type<tc>, window_params = [{transform_indices = @transform_0, window_bounds = array<i64: 128, 128>}, {transform_indices = @transform_1, window_bounds = array<i64: 128, 128>}, {transform_indices = @transform_2, window_bounds = array<i64: 1, 128>}, {transform_indices = @transform_3, window_bounds = array<i64: 128, 128>}]} {
    %c0_i32 = arith.constant 0 : i32
    %0 = arith.cmpi eq, %arg2, %c0_i32 : i32
    %1 = arith.extui %0 : i1 to i32
    %c0_i32_0 = arith.constant 0 : i32
    %2 = arith.cmpi ne, %1, %c0_i32_0 : i32
    scf.if %2 {
      %cst_10 = arith.constant 0.000000e+00 : f32
      %12 = vector.broadcast %cst_10 : f32 to vector<128x128xf32>
      %c0_11 = arith.constant 0 : index
      %c0_12 = arith.constant 0 : index
      %13 = vector.load %arg7[%c0_11, %c0_12] : memref<128x128xf32, #tpu.memory_space<vmem>>, vector<128x128xf32>
      tpu.vector_store %arg7[%c0_11, %c0_12], %12 {strides = array<i32>} : memref<128x128xf32, #tpu.memory_space<vmem>>, vector<128x128xf32>,
    } else {
    }
    %c0 = arith.constant 0 : index
    %c0_1 = arith.constant 0 : index
    %3 = vector.load %arg7[%c0, %c0_1] : memref<128x128xf32, #tpu.memory_space<vmem>>, vector<128x128xf32>
    %c0_2 = arith.constant 0 : index
    %c0_3 = arith.constant 0 : index
    %4 = vector.load %arg3[%c0_2, %c0_3] : memref<128x128xbf16, #tpu.memory_space<vmem>>, vector<128x128xbf16>
    %c0_4 = arith.constant 0 : index
    %c0_5 = arith.constant 0 : index
    %5 = vector.load %arg4[%c0_4, %c0_5] : memref<128x128xbf16, #tpu.memory_space<vmem>>, vector<128x128xbf16>
    %cst = arith.constant dense<0.000000e+00> : vector<128x128xf32>
    %6 = tpu.matmul %4, %5, %cst {dimension_numbers = #tpu.dot_dimension_numbers<[1], [0], [0], [1], [0, 0, 1, 1], [], []>} : vector<128x128xbf16>, vector<128x128xbf16>, vector<128x128xf32> -> vector<128x128xf32>
    %7 = arith.addf %3, %6 : vector<128x128xf32>
    %c0_6 = arith.constant 0 : index
    %c0_7 = arith.constant 0 : index
    %8 = vector.load %arg7[%c0_6, %c0_7] : memref<128x128xf32, #tpu.memory_space<vmem>>, vector<128x128xf32>
    tpu.vector_store %arg7[%c0_6, %c0_7], %7 {strides = array<i32>} : memref<128x128xf32, #tpu.memory_space<vmem>>, vector<128x128xf32>,
    %c0_i32_8 = arith.constant 0 : i32
    %9 = arith.cmpi eq, %arg2, %c0_i32_8 : i32
    %10 = arith.extui %9 : i1 to i32
    %c0_i32_9 = arith.constant 0 : i32
    %11 = arith.cmpi ne, %10, %c0_i32_9 : i32
    scf.if %11 {
      %c0_10 = arith.constant 0 : index
      %c0_11 = arith.constant 0 : index
      %12 = vector.load %arg7[%c0_10, %c0_11] : memref<128x128xf32, #tpu.memory_space<vmem>>, vector<128x128xf32>
      %c0_12 = arith.constant 0 : index
      %c0_13 = arith.constant 0 : index
      %13 = vector.load %arg5[%c0_12, %c0_13] : memref<1x128xf32, #tpu.memory_space<vmem>>, vector<1x128xf32>
      %14 = vector.broadcast %13 : vector<1x128xf32> to vector<128x128xf32>
      %15 = arith.addf %12, %14 : vector<128x128xf32>
      %cst_14 = arith.constant 0.000000e+00 : f32
      %16 = vector.broadcast %cst_14 : f32 to vector<128x128xf32>
      %17 = arith.maximumf %15, %16 : vector<128x128xf32>
      %c0_15 = arith.constant 0 : index
      %c0_16 = arith.constant 0 : index
      %18 = vector.load %arg6[%c0_15, %c0_16] : memref<128x128xf32, #tpu.memory_space<vmem>>, vector<128x128xf32>
      tpu.vector_store %arg6[%c0_15, %c0_16], %17 {strides = array<i32>} : memref<128x128xf32, #tpu.memory_space<vmem>>, vector<128x128xf32>,
    } else {
    }
    return
  }
  func.func @transform_0(%arg0: i32, %arg1: i32, %arg2: i32) -> (i32, i32) {
    %c0_i32 = arith.constant 0 : i32
    return %arg0, %arg2 : i32, i32
  }
  func.func @transform_1(%arg0: i32, %arg1: i32, %arg2: i32) -> (i32, i32) {
    %c0_i32 = arith.constant 0 : i32
    return %arg2, %arg1 : i32, i32
  }
  func.func @transform_2(%arg0: i32, %arg1: i32, %arg2: i32) -> (i32, i32) {
    %c0_i32 = arith.constant 0 : i32
    %c0_i32_0 = arith.constant 0 : i32
    return %c0_i32, %arg1 : i32, i32
  }
  func.func @transform_3(%arg0: i32, %arg1: i32, %arg2: i32) -> (i32, i32) {
    %c0_i32 = arith.constant 0 : i32
    return %arg0, %arg1 : i32, i32
  }
}

</mosaic_0001>

<llo_original>
// kernel: hyper_region_cl_forward.9
$region0: #{hyper_region_cl_forward.9}
  #allocation0 [shape = 'u32[]', space=smem, size = 0x4, offset = 0x4, fixed_abs, tag = 'smem constant byte address 0x4 - core index']
  #allocation1 [shape = 'u32[72,128]{1,0:T(1,128)}', space=vmem, size = 0x9000, scoped, tag = 'internal scratch']
  #allocation2 [shape = 'f32[128,128]{1,0:T(8,128)}', space=vmem, size = 0x10000, scoped, tag = 'scratch operand']
  #allocation3 [shape = 'f32[1]{0:T(128)S(6)}', space=smem, size = 0x200, scoped, tag = 'scoped memory for hyper_region_cl_forward.9']
  %s0 = inlined_call_operand.vmem [shape: bf16[128,128], index: 0, kind: input, shape index: {}]
  %s1 = inlined_call_operand.vmem [shape: bf16[128,128], index: 1, kind: input, shape index: {}]
  %s2 = inlined_call_operand.vmem [shape: f32[1,128], index: 2, kind: input, shape index: {}]
  %s3 = inlined_call_operand.<no memory space> [shape: f32[1], index: 3, kind: input, shape index: {}]
  %s4 = inlined_call_operand.vmem [shape: f32[128,128], index: 4, kind: output, shape index: {}]
  %s5 = sld [smem:[#allocation0]]
  $region34: #{hyper_region_cl_forward.9} parent=0
    _
  %s7 = ssub.s32 1, %s5
  %s8 = scalar_select 0, %s7, %s5
  %9 = sst [smem:[#allocation3]] %s3
  // Predicated region
  $region2: #{hyper_region_cl_forward.9} parent=0 // pred_check
    _
  $region3: #{hyper_region_cl_forward.9} parent=0 // pred_check_branch
    %11 = sbr.rel (0) target = $region5
  $region4: #{hyper_region_cl_forward.9} parent=0 // pred_region
    _
  $region5: #{hyper_region_cl_forward.9} parent=0 // pred_fallthru
    _
  // Predicated region
  $region6: #{hyper_region_cl_forward.9} parent=0 // pred_check
    _
  $region7: #{hyper_region_cl_forward.9} parent=0 // pred_check_branch
    %13 = sbr.rel (0) target = $region9
  $region8: #{hyper_region_cl_forward.9} parent=0 // pred_region
    _
  $region9: #{hyper_region_cl_forward.9} parent=0 // pred_fallthru
    _
  // Predicated region
  $region10: #{hyper_region_cl_forward.9} parent=0 // pred_check
    _
  $region11: #{hyper_region_cl_forward.9} parent=0 // pred_check_branch
    %15 = sbr.rel (0) target = $region13
  $region12: #{hyper_region_cl_forward.9} parent=0 // pred_region
    _
  $region13: #{hyper_region_cl_forward.9} parent=0 // pred_fallthru
    _
  // Predicated region
  $region14: #{hyper_region_cl_forward.9} parent=0 // pred_check
    _
  $region15: #{hyper_region_cl_forward.9} parent=0 // pred_check_branch
    %17 = sbr.rel (0) target = $region17
  $region16: #{hyper_region_cl_forward.9} parent=0 // pred_region
    _
  $region17: #{hyper_region_cl_forward.9} parent=0 // pred_fallthru
    _
  %p18 = scmp.eq.s32.totalorder 0, 0
  // Predicated region
  $region18: #{hyper_region_cl_forward.9} parent=0 // pred_check
    %p19 = pneg %p18
  $region19: #{hyper_region_cl_forward.9} parent=0 // pred_check_branch
    %21 = sbr.rel (%p19) target = $region21
  $region20: #{hyper_region_cl_forward.9} parent=0 // pred_region
    %22 = vst [vmem:[#allocation2] sm:$0xff] 0.0
    %23 = vst [vmem:[#allocation2 + $0x8] sm:$0xff] 0.0
    %24 = vst [vmem:[#allocation2 + $0x10] sm:$0xff] 0.0
    %25 = vst [vmem:[#allocation2 + $0x18] sm:$0xff] 0.0
    %26 = vst [vmem:[#allocation2 + $0x20] sm:$0xff] 0.0
    %27 = vst [vmem:[#allocation2 + $0x28] sm:$0xff] 0.0
    %28 = vst [vmem:[#allocation2 + $0x30] sm:$0xff] 0.0
    %29 = vst [vmem:[#allocation2 + $0x38] sm:$0xff] 0.0
    %30 = vst [vmem:[#allocation2 + $0x40] sm:$0xff] 0.0
    %31 = vst [vmem:[#allocation2 + $0x48] sm:$0xff] 0.0
    %32 = vst [vmem:[#allocation2 + $0x50] sm:$0xff] 0.0
    %33 = vst [vmem:[#allocation2 + $0x58] sm:$0xff] 0.0
    %34 = vst [vmem:[#allocation2 + $0x60] sm:$0xff] 0.0
    %35 = vst [vmem:[#allocation2 + $0x68] sm:$0xff] 0.0
    %36 = vst [vmem:[#allocation2 + $0x70] sm:$0xff] 0.0
    %37 = vst [vmem:[#allocation2 + $0x78] sm:$0xff] 0.0
  $region21: #{hyper_region_cl_forward.9} parent=0 // pred_fallthru
    _
  %v38 = vld [vmem:[#allocation2] sm:$0xff]
  %v39 = vld [vmem:[#allocation2 + $0x8] sm:$0xff]
  %v40 = vld [vmem:[#allocation2 + $0x10] sm:$0xff]
  %v41 = vld [vmem:[#allocation2 + $0x18] sm:$0xff]
  %v42 = vld [vmem:[#allocation2 + $0x20] sm:$0xff]
  %v43 = vld [vmem:[#allocation2 + $0x28] sm:$0xff]
  %v44 = vld [vmem:[#allocation2 + $0x30] sm:$0xff]
  %v45 = vld [vmem:[#allocation2 + $0x38] sm:$0xff]
  %v46 = vld [vmem:[#allocation2 + $0x40] sm:$0xff]
  %v47 = vld [vmem:[#allocation2 + $0x48] sm:$0xff]
  %v48 = vld [vmem:[#allocation2 + $0x50] sm:$0xff]
  %v49 = vld [vmem:[#allocation2 + $0x58] sm:$0xff]
  %v50 = vld [vmem:[#allocation2 + $0x60] sm:$0xff]
  %v51 = vld [vmem:[#allocation2 + $0x68] sm:$0xff]
  %v52 = vld [vmem:[#allocation2 + $0x70] sm:$0xff]
  %v53 = vld [vmem:[#allocation2 + $0x78] sm:$0xff]
  %v54 = vld [vmem:[%s0] sm:$0xf]
  %v55 = vld [vmem:[%s0 + $0x4] sm:$0xf]
  %v56 = vld [vmem:[%s0 + $0x8] sm:$0xf]
  %v57 = vld [vmem:[%s0 + $0xc] sm:$0xf]
  %v58 = vld [vmem:[%s0 + $0x10] sm:$0xf]
  %v59 = vld [vmem:[%s0 + $0x14] sm:$0xf]
  %v60 = vld [vmem:[%s0 + $0x18] sm:$0xf]
  %v61 = vld [vmem:[%s0 + $0x1c] sm:$0xf]
  %v62 = vld [vmem:[%s0 + $0x20] sm:$0xf]
  %v63 = vld [vmem:[%s0 + $0x24] sm:$0xf]
  %v64 = vld [vmem:[%s0 + $0x28] sm:$0xf]
  %v65 = vld [vmem:[%s0 + $0x2c] sm:$0xf]
  %v66 = vld [vmem:[%s0 + $0x30] sm:$0xf]
  %v67 = vld [vmem:[%s0 + $0x34] sm:$0xf]
  %v68 = vld [vmem:[%s0 + $0x38] sm:$0xf]
  %v69 = vld [vmem:[%s0 + $0x3c] sm:$0xf]
  %v70 = vld [vmem:[%s1] sm:$0xf]
  %v71 = vld [vmem:[%s1 + $0x4] sm:$0xf]
  %v72 = vld [vmem:[%s1 + $0x8] sm:$0xf]
  %v73 = vld [vmem:[%s1 + $0xc] sm:$0xf]
  %v74 = vld [vmem:[%s1 + $0x10] sm:$0xf]
  %v75 = vld [vmem:[%s1 + $0x14] sm:$0xf]
  %v76 = vld [vmem:[%s1 + $0x18] sm:$0xf]
  %v77 = vld [vmem:[%s1 + $0x1c] sm:$0xf]
  %v78 = vld [vmem:[%s1 + $0x20] sm:$0xf]
  %v79 = vld [vmem:[%s1 + $0x24] sm:$0xf]
  %v80 = vld [vmem:[%s1 + $0x28] sm:$0xf]
  %v81 = vld [vmem:[%s1 + $0x2c] sm:$0xf]
  %v82 = vld [vmem:[%s1 + $0x30] sm:$0xf]
  %v83 = vld [vmem:[%s1 + $0x34] sm:$0xf]
  %v84 = vld [vmem:[%s1 + $0x38] sm:$0xf]
  %v85 = vld [vmem:[%s1 + $0x3c] sm:$0xf]
  %v102 = vunpack.c.l.b16 %v54
  %v103 = vunpack.c.l.b16 %v55
  %v104 = vunpack.c.l.b16 %v56
  %v105 = vunpack.c.l.b16 %v57
  %v106 = vunpack.c.l.b16 %v58
  %v107 = vunpack.c.l.b16 %v59
  %v108 = vunpack.c.l.b16 %v60
  %v109 = vunpack.c.l.b16 %v61
  %v110 = vunpack.c.l.b16 %v62
  %v111 = vunpack.c.l.b16 %v63
  %v112 = vunpack.c.l.b16 %v64
  %v113 = vunpack.c.l.b16 %v65
  %v114 = vunpack.c.l.b16 %v66
  %v115 = vunpack.c.l.b16 %v67
  %v116 = vunpack.c.l.b16 %v68
  %v117 = vunpack.c.l.b16 %v69
  %v118 = vpack.c.b16 %v103, %v102
  %v119 = vpack.c.b16 %v105, %v104
  %v120 = vpack.c.b16 %v107, %v106
  %v121 = vpack.c.b16 %v109, %v108
  %v122 = vpack.c.b16 %v111, %v110
  %v123 = vpack.c.b16 %v113, %v112
  %v124 = vpack.c.b16 %v115, %v114
  %v125 = vpack.c.b16 %v117, %v116
  %v150 = vunpack.c.l.b16 %v70
  %v151 = vunpack.c.l.b16 %v71
  %v152 = vunpack.c.l.b16 %v72
  %v153 = vunpack.c.l.b16 %v73
  %v154 = vunpack.c.l.b16 %v74
  %v155 = vunpack.c.l.b16 %v75
  %v156 = vunpack.c.l.b16 %v76
  %v157 = vunpack.c.l.b16 %v77
  %v158 = vunpack.c.l.b16 %v78
  %v159 = vunpack.c.l.b16 %v79
  %v160 = vunpack.c.l.b16 %v80
  %v161 = vunpack.c.l.b16 %v81
  %v162 = vunpack.c.l.b16 %v82
  %v163 = vunpack.c.l.b16 %v83
  %v164 = vunpack.c.l.b16 %v84
  %v165 = vunpack.c.l.b16 %v85
  %v166 = vpack.c.b16 %v151, %v150
  %v167 = vpack.c.b16 %v153, %v152
  %v168 = vpack.c.b16 %v155, %v154
  %v169 = vpack.c.b16 %v157, %v156
  %v170 = vpack.c.b16 %v159, %v158
  %v171 = vpack.c.b16 %v161, %v160
  %v172 = vpack.c.b16 %v163, %v162
  %v173 = vpack.c.b16 %v165, %v164
  %182 = vmatpush.bf16.msra.mxu0 %v173
  %183 = vmatpush.bf16.msra.mxu0 %v172
  %184 = vmatpush.bf16.msra.mxu0 %v171
  %185 = vmatpush.bf16.msra.mxu0 %v170
  %186 = vmatpush.bf16.msra.mxu0 %v169
  %187 = vmatpush.bf16.msra.mxu0 %v168
  %188 = vmatpush.bf16.msra.mxu0 %v167
  %189 = vmatpush.bf16.msra.mxu0 %v166
  %190 = vmatmul.bf16.gmra.mxu0 %v118
  %v191 = vpop.f32.mrf.mxu0
  %v192 = vadd.f32 0.0, %v191
  %v193 = vpop.f32.mrf.mxu0
  %v194 = vadd.f32 0.0, %v193
  %195 = vmatmul.bf16.gmra.mxu0 %v119
  %v196 = vpop.f32.mrf.mxu0
  %v197 = vadd.f32 0.0, %v196
  %v198 = vpop.f32.mrf.mxu0
  %v199 = vadd.f32 0.0, %v198
  %200 = vmatmul.bf16.gmra.mxu0 %v120
  %v201 = vpop.f32.mrf.mxu0
  %v202 = vadd.f32 0.0, %v201
  %v203 = vpop.f32.mrf.mxu0
  %v204 = vadd.f32 0.0, %v203
  %205 = vmatmul.bf16.gmra.mxu0 %v121
  %v206 = vpop.f32.mrf.mxu0
  %v207 = vadd.f32 0.0, %v206
  %v208 = vpop.f32.mrf.mxu0
  %v209 = vadd.f32 0.0, %v208
  %210 = vmatmul.bf16.gmra.mxu0 %v122
  %v211 = vpop.f32.mrf.mxu0
  %v212 = vadd.f32 0.0, %v211
  %v213 = vpop.f32.mrf.mxu0
  %v214 = vadd.f32 0.0, %v213
  %215 = vmatmul.bf16.gmra.mxu0 %v123
  %v216 = vpop.f32.mrf.mxu0
  %v217 = vadd.f32 0.0, %v216
  %v218 = vpop.f32.mrf.mxu0
  %v219 = vadd.f32 0.0, %v218
  %220 = vmatmul.bf16.gmra.mxu0 %v124
  %v221 = vpop.f32.mrf.mxu0
  %v222 = vadd.f32 0.0, %v221
  %v223 = vpop.f32.mrf.mxu0
  %v224 = vadd.f32 0.0, %v223
  %225 = vmatmul.bf16.gmra.mxu0 %v125
  %v226 = vpop.f32.mrf.mxu0
  %v227 = vadd.f32 0.0, %v226
  %v228 = vpop.f32.mrf.mxu0
  %v229 = vadd.f32 0.0, %v228
  %230 = vdwg.mxu0
  %v231 = vadd.f32 %v38, %v192
  %v232 = vadd.f32 %v39, %v194
  %v233 = vadd.f32 %v40, %v197
  %v234 = vadd.f32 %v41, %v199
  %v235 = vadd.f32 %v42, %v202
  %v236 = vadd.f32 %v43, %v204
  %v237 = vadd.f32 %v44, %v207
  %v238 = vadd.f32 %v45, %v209
  %v239 = vadd.f32 %v46, %v212
  %v240 = vadd.f32 %v47, %v214
  %v241 = vadd.f32 %v48, %v217
  %v242 = vadd.f32 %v49, %v219
  %v243 = vadd.f32 %v50, %v222
  %v244 = vadd.f32 %v51, %v224
  %v245 = vadd.f32 %v52, %v227
  %v246 = vadd.f32 %v53, %v229
  %247 = vst [vmem:[#allocation2] sm:$0xff] %v231
  %248 = vst [vmem:[#allocation2 + $0x8] sm:$0xff] %v232
  %249 = vst [vmem:[#allocation2 + $0x10] sm:$0xff] %v233
  %250 = vst [vmem:[#allocation2 + $0x18] sm:$0xff] %v234
  %251 = vst [vmem:[#allocation2 + $0x20] sm:$0xff] %v235
  %252 = vst [vmem:[#allocation2 + $0x28] sm:$0xff] %v236
  %253 = vst [vmem:[#allocation2 + $0x30] sm:$0xff] %v237
  %254 = vst [vmem:[#allocation2 + $0x38] sm:$0xff] %v238
  %255 = vst [vmem:[#allocation2 + $0x40] sm:$0xff] %v239
  %256 = vst [vmem:[#allocation2 + $0x48] sm:$0xff] %v240
  %257 = vst [vmem:[#allocation2 + $0x50] sm:$0xff] %v241
  %258 = vst [vmem:[#allocation2 + $0x58] sm:$0xff] %v242
  %259 = vst [vmem:[#allocation2 + $0x60] sm:$0xff] %v243
  %260 = vst [vmem:[#allocation2 + $0x68] sm:$0xff] %v244
  %261 = vst [vmem:[#allocation2 + $0x70] sm:$0xff] %v245
  %262 = vst [vmem:[#allocation2 + $0x78] sm:$0xff] %v246
  // Predicated region
  $region22: #{hyper_region_cl_forward.9} parent=0 // pred_check
    %p263 = pneg %p18
  $region23: #{hyper_region_cl_forward.9} parent=0 // pred_check_branch
    %265 = sbr.rel (%p263) target = $region25
  $region24: #{hyper_region_cl_forward.9} parent=0 // pred_region
    %v266 = vld [vmem:[#allocation2] sm:$0xff]
    %v267 = vld [vmem:[#allocation2 + $0x8] sm:$0xff]
    %v268 = vld [vmem:[#allocation2 + $0x10] sm:$0xff]
    %v269 = vld [vmem:[#allocation2 + $0x18] sm:$0xff]
    %v270 = vld [vmem:[#allocation2 + $0x20] sm:$0xff]
    %v271 = vld [vmem:[#allocation2 + $0x28] sm:$0xff]
    %v272 = vld [vmem:[#allocation2 + $0x30] sm:$0xff]
    %v273 = vld [vmem:[#allocation2 + $0x38] sm:$0xff]
    %v274 = vld [vmem:[#allocation2 + $0x40] sm:$0xff]
    %v275 = vld [vmem:[#allocation2 + $0x48] sm:$0xff]
    %v276 = vld [vmem:[#allocation2 + $0x50] sm:$0xff]
    %v277 = vld [vmem:[#allocation2 + $0x58] sm:$0xff]
    %v278 = vld [vmem:[#allocation2 + $0x60] sm:$0xff]
    %v279 = vld [vmem:[#allocation2 + $0x68] sm:$0xff]
    %v280 = vld [vmem:[#allocation2 + $0x70] sm:$0xff]
    %v281 = vld [vmem:[#allocation2 + $0x78] sm:$0xff]
    %v282 = vld [vmem:[%s2] sm:$0x1]
    %v284 = vperm.slane %v282, 0
    %v286 = vadd.f32 %v266, %v284
    %v287 = vadd.f32 %v267, %v284
    %v288 = vadd.f32 %v268, %v284
    %v289 = vadd.f32 %v269, %v284
    %v290 = vadd.f32 %v270, %v284
    %v291 = vadd.f32 %v271, %v284
    %v292 = vadd.f32 %v272, %v284
    %v293 = vadd.f32 %v273, %v284
    %v294 = vadd.f32 %v274, %v284
    %v295 = vadd.f32 %v275, %v284
    %v296 = vadd.f32 %v276, %v284
    %v297 = vadd.f32 %v277, %v284
    %v298 = vadd.f32 %v278, %v284
    %v299 = vadd.f32 %v279, %v284
    %v300 = vadd.f32 %v280, %v284
    %v301 = vadd.f32 %v281, %v284
    %s302 = sld [smem:[#allocation3]]
    %vm303 = vcmp.gt.f32.partialorder %v286, 0.0
    %vm304 = vcmp.gt.f32.partialorder %v287, 0.0
    %vm305 = vcmp.gt.f32.partialorder %v288, 0.0
    %vm306 = vcmp.gt.f32.partialorder %v289, 0.0
    %vm307 = vcmp.gt.f32.partialorder %v290, 0.0
    %vm308 = vcmp.gt.f32.partialorder %v291, 0.0
    %vm309 = vcmp.gt.f32.partialorder %v292, 0.0
    %vm310 = vcmp.gt.f32.partialorder %v293, 0.0
    %vm311 = vcmp.gt.f32.partialorder %v294, 0.0
    %vm312 = vcmp.gt.f32.partialorder %v295, 0.0
    %vm313 = vcmp.gt.f32.partialorder %v296, 0.0
    %vm314 = vcmp.gt.f32.partialorder %v297, 0.0
    %vm315 = vcmp.gt.f32.partialorder %v298, 0.0
    %vm316 = vcmp.gt.f32.partialorder %v299, 0.0
    %vm317 = vcmp.gt.f32.partialorder %v300, 0.0
    %vm318 = vcmp.gt.f32.partialorder %v301, 0.0
    %v319 = vstv %s302
    %v320 = vmul.f32 %v319, %v286
    %v321 = vmul.f32 %v319, %v287
    %v322 = vmul.f32 %v319, %v288
    %v323 = vmul.f32 %v319, %v289
    %v324 = vmul.f32 %v319, %v290
    %v325 = vmul.f32 %v319, %v291
    %v326 = vmul.f32 %v319, %v292
    %v327 = vmul.f32 %v319, %v293
    %v328 = vmul.f32 %v319, %v294
    %v329 = vmul.f32 %v319, %v295
    %v330 = vmul.f32 %v319, %v296
    %v331 = vmul.f32 %v319, %v297
    %v332 = vmul.f32 %v319, %v298
    %v333 = vmul.f32 %v319, %v299
    %v334 = vmul.f32 %v319, %v300
    %v335 = vmul.f32 %v319, %v301
    %v336 = vsel %vm303, %v286, %v320
    %v337 = vsel %vm304, %v287, %v321
    %v338 = vsel %vm305, %v288, %v322
    %v339 = vsel %vm306, %v289, %v323
    %v340 = vsel %vm307, %v290, %v324
    %v341 = vsel %vm308, %v291, %v325
    %v342 = vsel %vm309, %v292, %v326
    %v343 = vsel %vm310, %v293, %v327
    %v344 = vsel %vm311, %v294, %v328
    %v345 = vsel %vm312, %v295, %v329
    %v346 = vsel %vm313, %v296, %v330
    %v347 = vsel %vm314, %v297, %v331
    %v348 = vsel %vm315, %v298, %v332
    %v349 = vsel %vm316, %v299, %v333
    %v350 = vsel %vm317, %v300, %v334
    %v351 = vsel %vm318, %v301, %v335
    %352 = vst [vmem:[%s4] sm:$0xff] %v336
    %353 = vst [vmem:[%s4 + $0x8] sm:$0xff] %v337
    %354 = vst [vmem:[%s4 + $0x10] sm:$0xff] %v338
    %355 = vst [vmem:[%s4 + $0x18] sm:$0xff] %v339
    %356 = vst [vmem:[%s4 + $0x20] sm:$0xff] %v340
    %357 = vst [vmem:[%s4 + $0x28] sm:$0xff] %v341
    %358 = vst [vmem:[%s4 + $0x30] sm:$0xff] %v342
    %359 = vst [vmem:[%s4 + $0x38] sm:$0xff] %v343
    %360 = vst [vmem:[%s4 + $0x40] sm:$0xff] %v344
    %361 = vst [vmem:[%s4 + $0x48] sm:$0xff] %v345
    %362 = vst [vmem:[%s4 + $0x50] sm:$0xff] %v346
    %363 = vst [vmem:[%s4 + $0x58] sm:$0xff] %v347
    %364 = vst [vmem:[%s4 + $0x60] sm:$0xff] %v348
    %365 = vst [vmem:[%s4 + $0x68] sm:$0xff] %v349
    %366 = vst [vmem:[%s4 + $0x70] sm:$0xff] %v350
    %367 = vst [vmem:[%s4 + $0x78] sm:$0xff] %v351
  $region25: #{hyper_region_cl_forward.9} parent=0 // pred_fallthru
    _
  // Predicated region
  $region26: #{hyper_region_cl_forward.9} parent=0 // pred_check
    _
  $region27: #{hyper_region_cl_forward.9} parent=0 // pred_check_branch
    %369 = sbr.rel (0) target = $region29
  $region28: #{hyper_region_cl_forward.9} parent=0 // pred_region
    _
  $region29: #{hyper_region_cl_forward.9} parent=0 // pred_fallthru
    _
  // Predicated region
  $region30: #{hyper_region_cl_forward.9} parent=0 // pred_check
    _
  $region31: #{hyper_region_cl_forward.9} parent=0 // pred_check_branch
    %371 = sbr.rel (0) target = $region33
  $region32: #{hyper_region_cl_forward.9} parent=0 // pred_region
    _
  $region33: #{hyper_region_cl_forward.9} parent=0 // pred_fallthru
    _

// kernel: hyper_region_cl_forward.8
$region0: #{hyper_region_cl_forward.8}
  #allocation0 [shape = 'u32[]', space=smem, size = 0x4, offset = 0x4, fixed_abs, tag = 'smem constant byte address 0x4 - core index']
  #allocation1 [shape = 'u32[72,128]{1,0:T(1,128)}', space=vmem, size = 0x9000, scoped, tag = 'internal scratch']
  #allocation2 [shape = 'f32[128,128]{1,0:T(8,128)}', space=vmem, size = 0x10000, scoped, tag = 'scratch operand']
  %s0 = inlined_call_operand.vmem [shape: bf16[128,128], index: 0, kind: input, shape index: {}]
  %s1 = inlined_call_operand.vmem [shape: bf16[128,128], index: 1, kind: input, shape index: {}]
  %s2 = inlined_call_operand.vmem [shape: f32[1,128], index: 2, kind: input, shape index: {}]
  %s3 = inlined_call_operand.vmem [shape: f32[128,128], index: 3, kind: output, shape index: {}]
  %s4 = sld [smem:[#allocation0]]
  $region30: #{hyper_region_cl_forward.8} parent=0
    _
  %s6 = ssub.s32 1, %s4
  %s7 = scalar_select 0, %s6, %s4
  // Predicated region
  $region2: #{hyper_region_cl_forward.8} parent=0 // pred_check
    _
  $region3: #{hyper_region_cl_forward.8} parent=0 // pred_check_branch
    %9 = sbr.rel (0) target = $region5
  $region4: #{hyper_region_cl_forward.8} parent=0 // pred_region
    _
  $region5: #{hyper_region_cl_forward.8} parent=0 // pred_fallthru
    _
  // Predicated region
  $region6: #{hyper_region_cl_forward.8} parent=0 // pred_check
    _
  $region7: #{hyper_region_cl_forward.8} parent=0 // pred_check_branch
    %11 = sbr.rel (0) target = $region9
  $region8: #{hyper_region_cl_forward.8} parent=0 // pred_region
    _
  $region9: #{hyper_region_cl_forward.8} parent=0 // pred_fallthru
    _
  // Predicated region
  $region10: #{hyper_region_cl_forward.8} parent=0 // pred_check
    _
  $region11: #{hyper_region_cl_forward.8} parent=0 // pred_check_branch
    %13 = sbr.rel (0) target = $region13
  $region12: #{hyper_region_cl_forward.8} parent=0 // pred_region
    _
  $region13: #{hyper_region_cl_forward.8} parent=0 // pred_fallthru
    _
  %p14 = scmp.eq.s32.totalorder 0, 0
  // Predicated region
  $region14: #{hyper_region_cl_forward.8} parent=0 // pred_check
    %p15 = pneg %p14
  $region15: #{hyper_region_cl_forward.8} parent=0 // pred_check_branch
    %17 = sbr.rel (%p15) target = $region17
  $region16: #{hyper_region_cl_forward.8} parent=0 // pred_region
    %18 = vst [vmem:[#allocation2] sm:$0xff] 0.0
    %19 = vst [vmem:[#allocation2 + $0x8] sm:$0xff] 0.0
    %20 = vst [vmem:[#allocation2 + $0x10] sm:$0xff] 0.0
    %21 = vst [vmem:[#allocation2 + $0x18] sm:$0xff] 0.0
    %22 = vst [vmem:[#allocation2 + $0x20] sm:$0xff] 0.0
    %23 = vst [vmem:[#allocation2 + $0x28] sm:$0xff] 0.0
    %24 = vst [vmem:[#allocation2 + $0x30] sm:$0xff] 0.0
    %25 = vst [vmem:[#allocation2 + $0x38] sm:$0xff] 0.0
    %26 = vst [vmem:[#allocation2 + $0x40] sm:$0xff] 0.0
    %27 = vst [vmem:[#allocation2 + $0x48] sm:$0xff] 0.0
    %28 = vst [vmem:[#allocation2 + $0x50] sm:$0xff] 0.0
    %29 = vst [vmem:[#allocation2 + $0x58] sm:$0xff] 0.0
    %30 = vst [vmem:[#allocation2 + $0x60] sm:$0xff] 0.0
    %31 = vst [vmem:[#allocation2 + $0x68] sm:$0xff] 0.0
    %32 = vst [vmem:[#allocation2 + $0x70] sm:$0xff] 0.0
    %33 = vst [vmem:[#allocation2 + $0x78] sm:$0xff] 0.0
  $region17: #{hyper_region_cl_forward.8} parent=0 // pred_fallthru
    _
  %v34 = vld [vmem:[#allocation2] sm:$0xff]
  %v35 = vld [vmem:[#allocation2 + $0x8] sm:$0xff]
  %v36 = vld [vmem:[#allocation2 + $0x10] sm:$0xff]
  %v37 = vld [vmem:[#allocation2 + $0x18] sm:$0xff]
  %v38 = vld [vmem:[#allocation2 + $0x20] sm:$0xff]
  %v39 = vld [vmem:[#allocation2 + $0x28] sm:$0xff]
  %v40 = vld [vmem:[#allocation2 + $0x30] sm:$0xff]
  %v41 = vld [vmem:[#allocation2 + $0x38] sm:$0xff]
  %v42 = vld [vmem:[#allocation2 + $0x40] sm:$0xff]
  %v43 = vld [vmem:[#allocation2 + $0x48] sm:$0xff]
  %v44 = vld [vmem:[#allocation2 + $0x50] sm:$0xff]
  %v45 = vld [vmem:[#allocation2 + $0x58] sm:$0xff]
  %v46 = vld [vmem:[#allocation2 + $0x60] sm:$0xff]
  %v47 = vld [vmem:[#allocation2 + $0x68] sm:$0xff]
  %v48 = vld [vmem:[#allocation2 + $0x70] sm:$0xff]
  %v49 = vld [vmem:[#allocation2 + $0x78] sm:$0xff]
  %v50 = vld [vmem:[%s0] sm:$0xf]
  %v51 = vld [vmem:[%s0 + $0x4] sm:$0xf]
  %v52 = vld [vmem:[%s0 + $0x8] sm:$0xf]
  %v53 = vld [vmem:[%s0 + $0xc] sm:$0xf]
  %v54 = vld [vmem:[%s0 + $0x10] sm:$0xf]
  %v55 = vld [vmem:[%s0 + $0x14] sm:$0xf]
  %v56 = vld [vmem:[%s0 + $0x18] sm:$0xf]
  %v57 = vld [vmem:[%s0 + $0x1c] sm:$0xf]
  %v58 = vld [vmem:[%s0 + $0x20] sm:$0xf]
  %v59 = vld [vmem:[%s0 + $0x24] sm:$0xf]
  %v60 = vld [vmem:[%s0 + $0x28] sm:$0xf]
  %v61 = vld [vmem:[%s0 + $0x2c] sm:$0xf]
  %v62 = vld [vmem:[%s0 + $0x30] sm:$0xf]
  %v63 = vld [vmem:[%s0 + $0x34] sm:$0xf]
  %v64 = vld [vmem:[%s0 + $0x38] sm:$0xf]
  %v65 = vld [vmem:[%s0 + $0x3c] sm:$0xf]
  %v66 = vld [vmem:[%s1] sm:$0xf]
  %v67 = vld [vmem:[%s1 + $0x4] sm:$0xf]
  %v68 = vld [vmem:[%s1 + $0x8] sm:$0xf]
  %v69 = vld [vmem:[%s1 + $0xc] sm:$0xf]
  %v70 = vld [vmem:[%s1 + $0x10] sm:$0xf]
  %v71 = vld [vmem:[%s1 + $0x14] sm:$0xf]
  %v72 = vld [vmem:[%s1 + $0x18] sm:$0xf]
  %v73 = vld [vmem:[%s1 + $0x1c] sm:$0xf]
  %v74 = vld [vmem:[%s1 + $0x20] sm:$0xf]
  %v75 = vld [vmem:[%s1 + $0x24] sm:$0xf]
  %v76 = vld [vmem:[%s1 + $0x28] sm:$0xf]
  %v77 = vld [vmem:[%s1 + $0x2c] sm:$0xf]
  %v78 = vld [vmem:[%s1 + $0x30] sm:$0xf]
  %v79 = vld [vmem:[%s1 + $0x34] sm:$0xf]
  %v80 = vld [vmem:[%s1 + $0x38] sm:$0xf]
  %v81 = vld [vmem:[%s1 + $0x3c] sm:$0xf]
  %v98 = vunpack.c.l.b16 %v50
  %v99 = vunpack.c.l.b16 %v51
  %v100 = vunpack.c.l.b16 %v52
  %v101 = vunpack.c.l.b16 %v53
  %v102 = vunpack.c.l.b16 %v54
  %v103 = vunpack.c.l.b16 %v55
  %v104 = vunpack.c.l.b16 %v56
  %v105 = vunpack.c.l.b16 %v57
  %v106 = vunpack.c.l.b16 %v58
  %v107 = vunpack.c.l.b16 %v59
  %v108 = vunpack.c.l.b16 %v60
  %v109 = vunpack.c.l.b16 %v61
  %v110 = vunpack.c.l.b16 %v62
  %v111 = vunpack.c.l.b16 %v63
  %v112 = vunpack.c.l.b16 %v64
  %v113 = vunpack.c.l.b16 %v65
  %v114 = vpack.c.b16 %v99, %v98
  %v115 = vpack.c.b16 %v101, %v100
  %v116 = vpack.c.b16 %v103, %v102
  %v117 = vpack.c.b16 %v105, %v104
  %v118 = vpack.c.b16 %v107, %v106
  %v119 = vpack.c.b16 %v109, %v108
  %v120 = vpack.c.b16 %v111, %v110
  %v121 = vpack.c.b16 %v113, %v112
  %v146 = vunpack.c.l.b16 %v66
  %v147 = vunpack.c.l.b16 %v67
  %v148 = vunpack.c.l.b16 %v68
  %v149 = vunpack.c.l.b16 %v69
  %v150 = vunpack.c.l.b16 %v70
  %v151 = vunpack.c.l.b16 %v71
  %v152 = vunpack.c.l.b16 %v72
  %v153 = vunpack.c.l.b16 %v73
  %v154 = vunpack.c.l.b16 %v74
  %v155 = vunpack.c.l.b16 %v75
  %v156 = vunpack.c.l.b16 %v76
  %v157 = vunpack.c.l.b16 %v77
  %v158 = vunpack.c.l.b16 %v78
  %v159 = vunpack.c.l.b16 %v79
  %v160 = vunpack.c.l.b16 %v80
  %v161 = vunpack.c.l.b16 %v81
  %v162 = vpack.c.b16 %v147, %v146
  %v163 = vpack.c.b16 %v149, %v148
  %v164 = vpack.c.b16 %v151, %v150
  %v165 = vpack.c.b16 %v153, %v152
  %v166 = vpack.c.b16 %v155, %v154
  %v167 = vpack.c.b16 %v157, %v156
  %v168 = vpack.c.b16 %v159, %v158
  %v169 = vpack.c.b16 %v161, %v160
  %178 = vmatpush.bf16.msra.mxu0 %v169
  %179 = vmatpush.bf16.msra.mxu0 %v168
  %180 = vmatpush.bf16.msra.mxu0 %v167
  %181 = vmatpush.bf16.msra.mxu0 %v166
  %182 = vmatpush.bf16.msra.mxu0 %v165
  %183 = vmatpush.bf16.msra.mxu0 %v164
  %184 = vmatpush.bf16.msra.mxu0 %v163
  %185 = vmatpush.bf16.msra.mxu0 %v162
  %186 = vmatmul.bf16.gmra.mxu0 %v114
  %v187 = vpop.f32.mrf.mxu0
  %v188 = vadd.f32 0.0, %v187
  %v189 = vpop.f32.mrf.mxu0
  %v190 = vadd.f32 0.0, %v189
  %191 = vmatmul.bf16.gmra.mxu0 %v115
  %v192 = vpop.f32.mrf.mxu0
  %v193 = vadd.f32 0.0, %v192
  %v194 = vpop.f32.mrf.mxu0
  %v195 = vadd.f32 0.0, %v194
  %196 = vmatmul.bf16.gmra.mxu0 %v116
  %v197 = vpop.f32.mrf.mxu0
  %v198 = vadd.f32 0.0, %v197
  %v199 = vpop.f32.mrf.mxu0
  %v200 = vadd.f32 0.0, %v199
  %201 = vmatmul.bf16.gmra.mxu0 %v117
  %v202 = vpop.f32.mrf.mxu0
  %v203 = vadd.f32 0.0, %v202
  %v204 = vpop.f32.mrf.mxu0
  %v205 = vadd.f32 0.0, %v204
  %206 = vmatmul.bf16.gmra.mxu0 %v118
  %v207 = vpop.f32.mrf.mxu0
  %v208 = vadd.f32 0.0, %v207
  %v209 = vpop.f32.mrf.mxu0
  %v210 = vadd.f32 0.0, %v209
  %211 = vmatmul.bf16.gmra.mxu0 %v119
  %v212 = vpop.f32.mrf.mxu0
  %v213 = vadd.f32 0.0, %v212
  %v214 = vpop.f32.mrf.mxu0
  %v215 = vadd.f32 0.0, %v214
  %216 = vmatmul.bf16.gmra.mxu0 %v120
  %v217 = vpop.f32.mrf.mxu0
  %v218 = vadd.f32 0.0, %v217
  %v219 = vpop.f32.mrf.mxu0
  %v220 = vadd.f32 0.0, %v219
  %221 = vmatmul.bf16.gmra.mxu0 %v121
  %v222 = vpop.f32.mrf.mxu0
  %v223 = vadd.f32 0.0, %v222
  %v224 = vpop.f32.mrf.mxu0
  %v225 = vadd.f32 0.0, %v224
  %226 = vdwg.mxu0
  %v227 = vadd.f32 %v34, %v188
  %v228 = vadd.f32 %v35, %v190
  %v229 = vadd.f32 %v36, %v193
  %v230 = vadd.f32 %v37, %v195
  %v231 = vadd.f32 %v38, %v198
  %v232 = vadd.f32 %v39, %v200
  %v233 = vadd.f32 %v40, %v203
  %v234 = vadd.f32 %v41, %v205
  %v235 = vadd.f32 %v42, %v208
  %v236 = vadd.f32 %v43, %v210
  %v237 = vadd.f32 %v44, %v213
  %v238 = vadd.f32 %v45, %v215
  %v239 = vadd.f32 %v46, %v218
  %v240 = vadd.f32 %v47, %v220
  %v241 = vadd.f32 %v48, %v223
  %v242 = vadd.f32 %v49, %v225
  %243 = vst [vmem:[#allocation2] sm:$0xff] %v227
  %244 = vst [vmem:[#allocation2 + $0x8] sm:$0xff] %v228
  %245 = vst [vmem:[#allocation2 + $0x10] sm:$0xff] %v229
  %246 = vst [vmem:[#allocation2 + $0x18] sm:$0xff] %v230
  %247 = vst [vmem:[#allocation2 + $0x20] sm:$0xff] %v231
  %248 = vst [vmem:[#allocation2 + $0x28] sm:$0xff] %v232
  %249 = vst [vmem:[#allocation2 + $0x30] sm:$0xff] %v233
  %250 = vst [vmem:[#allocation2 + $0x38] sm:$0xff] %v234
  %251 = vst [vmem:[#allocation2 + $0x40] sm:$0xff] %v235
  %252 = vst [vmem:[#allocation2 + $0x48] sm:$0xff] %v236
  %253 = vst [vmem:[#allocation2 + $0x50] sm:$0xff] %v237
  %254 = vst [vmem:[#allocation2 + $0x58] sm:$0xff] %v238
  %255 = vst [vmem:[#allocation2 + $0x60] sm:$0xff] %v239
  %256 = vst [vmem:[#allocation2 + $0x68] sm:$0xff] %v240
  %257 = vst [vmem:[#allocation2 + $0x70] sm:$0xff] %v241
  %258 = vst [vmem:[#allocation2 + $0x78] sm:$0xff] %v242
  // Predicated region
  $region18: #{hyper_region_cl_forward.8} parent=0 // pred_check
    %p259 = pneg %p14
  $region19: #{hyper_region_cl_forward.8} parent=0 // pred_check_branch
    %261 = sbr.rel (%p259) target = $region21
  $region20: #{hyper_region_cl_forward.8} parent=0 // pred_region
    %v262 = vld [vmem:[#allocation2] sm:$0xff]
    %v263 = vld [vmem:[#allocation2 + $0x8] sm:$0xff]
    %v264 = vld [vmem:[#allocation2 + $0x10] sm:$0xff]
    %v265 = vld [vmem:[#allocation2 + $0x18] sm:$0xff]
    %v266 = vld [vmem:[#allocation2 + $0x20] sm:$0xff]
    %v267 = vld [vmem:[#allocation2 + $0x28] sm:$0xff]
    %v268 = vld [vmem:[#allocation2 + $0x30] sm:$0xff]
    %v269 = vld [vmem:[#allocation2 + $0x38] sm:$0xff]
    %v270 = vld [vmem:[#allocation2 + $0x40] sm:$0xff]
    %v271 = vld [vmem:[#allocation2 + $0x48] sm:$0xff]
    %v272 = vld [vmem:[#allocation2 + $0x50] sm:$0xff]
    %v273 = vld [vmem:[#allocation2 + $0x58] sm:$0xff]
    %v274 = vld [vmem:[#allocation2 + $0x60] sm:$0xff]
    %v275 = vld [vmem:[#allocation2 + $0x68] sm:$0xff]
    %v276 = vld [vmem:[#allocation2 + $0x70] sm:$0xff]
    %v277 = vld [vmem:[#allocation2 + $0x78] sm:$0xff]
    %v278 = vld [vmem:[%s2] sm:$0x1]
    %v280 = vperm.slane %v278, 0
    %v282 = vadd.f32 %v262, %v280
    %v283 = vadd.f32 %v263, %v280
    %v284 = vadd.f32 %v264, %v280
    %v285 = vadd.f32 %v265, %v280
    %v286 = vadd.f32 %v266, %v280
    %v287 = vadd.f32 %v267, %v280
    %v288 = vadd.f32 %v268, %v280
    %v289 = vadd.f32 %v269, %v280
    %v290 = vadd.f32 %v270, %v280
    %v291 = vadd.f32 %v271, %v280
    %v292 = vadd.f32 %v272, %v280
    %v293 = vadd.f32 %v273, %v280
    %v294 = vadd.f32 %v274, %v280
    %v295 = vadd.f32 %v275, %v280
    %v296 = vadd.f32 %v276, %v280
    %v297 = vadd.f32 %v277, %v280
    %298 = vst [vmem:[%s3] sm:$0xff] %v282
    %299 = vst [vmem:[%s3 + $0x8] sm:$0xff] %v283
    %300 = vst [vmem:[%s3 + $0x10] sm:$0xff] %v284
    %301 = vst [vmem:[%s3 + $0x18] sm:$0xff] %v285
    %302 = vst [vmem:[%s3 + $0x20] sm:$0xff] %v286
    %303 = vst [vmem:[%s3 + $0x28] sm:$0xff] %v287
    %304 = vst [vmem:[%s3 + $0x30] sm:$0xff] %v288
    %305 = vst [vmem:[%s3 + $0x38] sm:$0xff] %v289
    %306 = vst [vmem:[%s3 + $0x40] sm:$0xff] %v290
    %307 = vst [vmem:[%s3 + $0x48] sm:$0xff] %v291
    %308 = vst [vmem:[%s3 + $0x50] sm:$0xff] %v292
    %309 = vst [vmem:[%s3 + $0x58] sm:$0xff] %v293
    %310 = vst [vmem:[%s3 + $0x60] sm:$0xff] %v294
    %311 = vst [vmem:[%s3 + $0x68] sm:$0xff] %v295
    %312 = vst [vmem:[%s3 + $0x70] sm:$0xff] %v296
    %313 = vst [vmem:[%s3 + $0x78] sm:$0xff] %v297
  $region21: #{hyper_region_cl_forward.8} parent=0 // pred_fallthru
    _
  // Predicated region
  $region22: #{hyper_region_cl_forward.8} parent=0 // pred_check
    _
  $region23: #{hyper_region_cl_forward.8} parent=0 // pred_check_branch
    %315 = sbr.rel (0) target = $region25
  $region24: #{hyper_region_cl_forward.8} parent=0 // pred_region
    _
  $region25: #{hyper_region_cl_forward.8} parent=0 // pred_fallthru
    _
  // Predicated region
  $region26: #{hyper_region_cl_forward.8} parent=0 // pred_check
    _
  $region27: #{hyper_region_cl_forward.8} parent=0 // pred_check_branch
    %317 = sbr.rel (0) target = $region29
  $region28: #{hyper_region_cl_forward.8} parent=0 // pred_region
    _
  $region29: #{hyper_region_cl_forward.8} parent=0 // pred_fallthru
    _

// kernel: hyper_region_cl_forward.6
$region0: #{hyper_region_cl_forward.6}
  #allocation0 [shape = 'u32[]', space=smem, size = 0x4, offset = 0x4, fixed_abs, tag = 'smem constant byte address 0x4 - core index']
  #allocation1 [shape = 'u32[72,128]{1,0:T(1,128)}', space=vmem, size = 0x9000, scoped, tag = 'internal scratch']
  #allocation2 [shape = 'f32[128,128]{1,0:T(8,128)}', space=vmem, size = 0x10000, scoped, tag = 'scratch operand']
  %s0 = inlined_call_operand.vmem [shape: bf16[128,128], index: 0, kind: input, shape index: {}]
  %s1 = inlined_call_operand.vmem [shape: bf16[128,128], index: 1, kind: input, shape index: {}]
  %s2 = inlined_call_operand.vmem [shape: f32[1,128], index: 2, kind: input, shape index: {}]
  %s3 = inlined_call_operand.vmem [shape: f32[128,128], index: 3, kind: output, shape index: {}]
  %s4 = sld [smem:[#allocation0]]
  $region30: #{hyper_region_cl_forward.6} parent=0
    _
  %s6 = ssub.s32 1, %s4
  %s7 = scalar_select 0, %s6, %s4
  // Predicated region
  $region2: #{hyper_region_cl_forward.6} parent=0 // pred_check
    _
  $region3: #{hyper_region_cl_forward.6} parent=0 // pred_check_branch
    %9 = sbr.rel (0) target = $region5
  $region4: #{hyper_region_cl_forward.6} parent=0 // pred_region
    _
  $region5: #{hyper_region_cl_forward.6} parent=0 // pred_fallthru
    _
  // Predicated region
  $region6: #{hyper_region_cl_forward.6} parent=0 // pred_check
    _
  $region7: #{hyper_region_cl_forward.6} parent=0 // pred_check_branch
    %11 = sbr.rel (0) target = $region9
  $region8: #{hyper_region_cl_forward.6} parent=0 // pred_region
    _
  $region9: #{hyper_region_cl_forward.6} parent=0 // pred_fallthru
    _
  // Predicated region
  $region10: #{hyper_region_cl_forward.6} parent=0 // pred_check
    _
  $region11: #{hyper_region_cl_forward.6} parent=0 // pred_check_branch
    %13 = sbr.rel (0) target = $region13
  $region12: #{hyper_region_cl_forward.6} parent=0 // pred_region
    _
  $region13: #{hyper_region_cl_forward.6} parent=0 // pred_fallthru
    _
  %p14 = scmp.eq.s32.totalorder 0, 0
  // Predicated region
  $region14: #{hyper_region_cl_forward.6} parent=0 // pred_check
    %p15 = pneg %p14
  $region15: #{hyper_region_cl_forward.6} parent=0 // pred_check_branch
    %17 = sbr.rel (%p15) target = $region17
  $region16: #{hyper_region_cl_forward.6} parent=0 // pred_region
    %18 = vst [vmem:[#allocation2] sm:$0xff] 0.0
    %19 = vst [vmem:[#allocation2 + $0x8] sm:$0xff] 0.0
    %20 = vst [vmem:[#allocation2 + $0x10] sm:$0xff] 0.0
    %21 = vst [vmem:[#allocation2 + $0x18] sm:$0xff] 0.0
    %22 = vst [vmem:[#allocation2 + $0x20] sm:$0xff] 0.0
    %23 = vst [vmem:[#allocation2 + $0x28] sm:$0xff] 0.0
    %24 = vst [vmem:[#allocation2 + $0x30] sm:$0xff] 0.0
    %25 = vst [vmem:[#allocation2 + $0x38] sm:$0xff] 0.0
    %26 = vst [vmem:[#allocation2 + $0x40] sm:$0xff] 0.0
    %27 = vst [vmem:[#allocation2 + $0x48] sm:$0xff] 0.0
    %28 = vst [vmem:[#allocation2 + $0x50] sm:$0xff] 0.0
    %29 = vst [vmem:[#allocation2 + $0x58] sm:$0xff] 0.0
    %30 = vst [vmem:[#allocation2 + $0x60] sm:$0xff] 0.0
    %31 = vst [vmem:[#allocation2 + $0x68] sm:$0xff] 0.0
    %32 = vst [vmem:[#allocation2 + $0x70] sm:$0xff] 0.0
    %33 = vst [vmem:[#allocation2 + $0x78] sm:$0xff] 0.0
  $region17: #{hyper_region_cl_forward.6} parent=0 // pred_fallthru
    _
  %v34 = vld [vmem:[#allocation2] sm:$0xff]
  %v35 = vld [vmem:[#allocation2 + $0x8] sm:$0xff]
  %v36 = vld [vmem:[#allocation2 + $0x10] sm:$0xff]
  %v37 = vld [vmem:[#allocation2 + $0x18] sm:$0xff]
  %v38 = vld [vmem:[#allocation2 + $0x20] sm:$0xff]
  %v39 = vld [vmem:[#allocation2 + $0x28] sm:$0xff]
  %v40 = vld [vmem:[#allocation2 + $0x30] sm:$0xff]
  %v41 = vld [vmem:[#allocation2 + $0x38] sm:$0xff]
  %v42 = vld [vmem:[#allocation2 + $0x40] sm:$0xff]
  %v43 = vld [vmem:[#allocation2 + $0x48] sm:$0xff]
  %v44 = vld [vmem:[#allocation2 + $0x50] sm:$0xff]
  %v45 = vld [vmem:[#allocation2 + $0x58] sm:$0xff]
  %v46 = vld [vmem:[#allocation2 + $0x60] sm:$0xff]
  %v47 = vld [vmem:[#allocation2 + $0x68] sm:$0xff]
  %v48 = vld [vmem:[#allocation2 + $0x70] sm:$0xff]
  %v49 = vld [vmem:[#allocation2 + $0x78] sm:$0xff]
  %v50 = vld [vmem:[%s0] sm:$0xf]
  %v51 = vld [vmem:[%s0 + $0x4] sm:$0xf]
  %v52 = vld [vmem:[%s0 + $0x8] sm:$0xf]
  %v53 = vld [vmem:[%s0 + $0xc] sm:$0xf]
  %v54 = vld [vmem:[%s0 + $0x10] sm:$0xf]
  %v55 = vld [vmem:[%s0 + $0x14] sm:$0xf]
  %v56 = vld [vmem:[%s0 + $0x18] sm:$0xf]
  %v57 = vld [vmem:[%s0 + $0x1c] sm:$0xf]
  %v58 = vld [vmem:[%s0 + $0x20] sm:$0xf]
  %v59 = vld [vmem:[%s0 + $0x24] sm:$0xf]
  %v60 = vld [vmem:[%s0 + $0x28] sm:$0xf]
  %v61 = vld [vmem:[%s0 + $0x2c] sm:$0xf]
  %v62 = vld [vmem:[%s0 + $0x30] sm:$0xf]
  %v63 = vld [vmem:[%s0 + $0x34] sm:$0xf]
  %v64 = vld [vmem:[%s0 + $0x38] sm:$0xf]
  %v65 = vld [vmem:[%s0 + $0x3c] sm:$0xf]
  %v66 = vld [vmem:[%s1] sm:$0xf]
  %v67 = vld [vmem:[%s1 + $0x4] sm:$0xf]
  %v68 = vld [vmem:[%s1 + $0x8] sm:$0xf]
  %v69 = vld [vmem:[%s1 + $0xc] sm:$0xf]
  %v70 = vld [vmem:[%s1 + $0x10] sm:$0xf]
  %v71 = vld [vmem:[%s1 + $0x14] sm:$0xf]
  %v72 = vld [vmem:[%s1 + $0x18] sm:$0xf]
  %v73 = vld [vmem:[%s1 + $0x1c] sm:$0xf]
  %v74 = vld [vmem:[%s1 + $0x20] sm:$0xf]
  %v75 = vld [vmem:[%s1 + $0x24] sm:$0xf]
  %v76 = vld [vmem:[%s1 + $0x28] sm:$0xf]
  %v77 = vld [vmem:[%s1 + $0x2c] sm:$0xf]
  %v78 = vld [vmem:[%s1 + $0x30] sm:$0xf]
  %v79 = vld [vmem:[%s1 + $0x34] sm:$0xf]
  %v80 = vld [vmem:[%s1 + $0x38] sm:$0xf]
  %v81 = vld [vmem:[%s1 + $0x3c] sm:$0xf]
  %v98 = vunpack.c.l.b16 %v50
  %v99 = vunpack.c.l.b16 %v51
  %v100 = vunpack.c.l.b16 %v52
  %v101 = vunpack.c.l.b16 %v53
  %v102 = vunpack.c.l.b16 %v54
  %v103 = vunpack.c.l.b16 %v55
  %v104 = vunpack.c.l.b16 %v56
  %v105 = vunpack.c.l.b16 %v57
  %v106 = vunpack.c.l.b16 %v58
  %v107 = vunpack.c.l.b16 %v59
  %v108 = vunpack.c.l.b16 %v60
  %v109 = vunpack.c.l.b16 %v61
  %v110 = vunpack.c.l.b16 %v62
  %v111 = vunpack.c.l.b16 %v63
  %v112 = vunpack.c.l.b16 %v64
  %v113 = vunpack.c.l.b16 %v65
  %v114 = vpack.c.b16 %v99, %v98
  %v115 = vpack.c.b16 %v101, %v100
  %v116 = vpack.c.b16 %v103, %v102
  %v117 = vpack.c.b16 %v105, %v104
  %v118 = vpack.c.b16 %v107, %v106
  %v119 = vpack.c.b16 %v109, %v108
  %v120 = vpack.c.b16 %v111, %v110
  %v121 = vpack.c.b16 %v113, %v112
  %v146 = vunpack.c.l.b16 %v66
  %v147 = vunpack.c.l.b16 %v67
  %v148 = vunpack.c.l.b16 %v68
  %v149 = vunpack.c.l.b16 %v69
  %v150 = vunpack.c.l.b16 %v70
  %v151 = vunpack.c.l.b16 %v71
  %v152 = vunpack.c.l.b16 %v72
  %v153 = vunpack.c.l.b16 %v73
  %v154 = vunpack.c.l.b16 %v74
  %v155 = vunpack.c.l.b16 %v75
  %v156 = vunpack.c.l.b16 %v76
  %v157 = vunpack.c.l.b16 %v77
  %v158 = vunpack.c.l.b16 %v78
  %v159 = vunpack.c.l.b16 %v79
  %v160 = vunpack.c.l.b16 %v80
  %v161 = vunpack.c.l.b16 %v81
  %v162 = vpack.c.b16 %v147, %v146
  %v163 = vpack.c.b16 %v149, %v148
  %v164 = vpack.c.b16 %v151, %v150
  %v165 = vpack.c.b16 %v153, %v152
  %v166 = vpack.c.b16 %v155, %v154
  %v167 = vpack.c.b16 %v157, %v156
  %v168 = vpack.c.b16 %v159, %v158
  %v169 = vpack.c.b16 %v161, %v160
  %178 = vmatpush.bf16.msra.mxu0 %v169
  %179 = vmatpush.bf16.msra.mxu0 %v168
  %180 = vmatpush.bf16.msra.mxu0 %v167
  %181 = vmatpush.bf16.msra.mxu0 %v166
  %182 = vmatpush.bf16.msra.mxu0 %v165
  %183 = vmatpush.bf16.msra.mxu0 %v164
  %184 = vmatpush.bf16.msra.mxu0 %v163
  %185 = vmatpush.bf16.msra.mxu0 %v162
  %186 = vmatmul.bf16.gmra.mxu0 %v114
  %v187 = vpop.f32.mrf.mxu0
  %v188 = vadd.f32 0.0, %v187
  %v189 = vpop.f32.mrf.mxu0
  %v190 = vadd.f32 0.0, %v189
  %191 = vmatmul.bf16.gmra.mxu0 %v115
  %v192 = vpop.f32.mrf.mxu0
  %v193 = vadd.f32 0.0, %v192
  %v194 = vpop.f32.mrf.mxu0
  %v195 = vadd.f32 0.0, %v194
  %196 = vmatmul.bf16.gmra.mxu0 %v116
  %v197 = vpop.f32.mrf.mxu0
  %v198 = vadd.f32 0.0, %v197
  %v199 = vpop.f32.mrf.mxu0
  %v200 = vadd.f32 0.0, %v199
  %201 = vmatmul.bf16.gmra.mxu0 %v117
  %v202 = vpop.f32.mrf.mxu0
  %v203 = vadd.f32 0.0, %v202
  %v204 = vpop.f32.mrf.mxu0
  %v205 = vadd.f32 0.0, %v204
  %206 = vmatmul.bf16.gmra.mxu0 %v118
  %v207 = vpop.f32.mrf.mxu0
  %v208 = vadd.f32 0.0, %v207
  %v209 = vpop.f32.mrf.mxu0
  %v210 = vadd.f32 0.0, %v209
  %211 = vmatmul.bf16.gmra.mxu0 %v119
  %v212 = vpop.f32.mrf.mxu0
  %v213 = vadd.f32 0.0, %v212
  %v214 = vpop.f32.mrf.mxu0
  %v215 = vadd.f32 0.0, %v214
  %216 = vmatmul.bf16.gmra.mxu0 %v120
  %v217 = vpop.f32.mrf.mxu0
  %v218 = vadd.f32 0.0, %v217
  %v219 = vpop.f32.mrf.mxu0
  %v220 = vadd.f32 0.0, %v219
  %221 = vmatmul.bf16.gmra.mxu0 %v121
  %v222 = vpop.f32.mrf.mxu0
  %v223 = vadd.f32 0.0, %v222
  %v224 = vpop.f32.mrf.mxu0
  %v225 = vadd.f32 0.0, %v224
  %226 = vdwg.mxu0
  %v227 = vadd.f32 %v34, %v188
  %v228 = vadd.f32 %v35, %v190
  %v229 = vadd.f32 %v36, %v193
  %v230 = vadd.f32 %v37, %v195
  %v231 = vadd.f32 %v38, %v198
  %v232 = vadd.f32 %v39, %v200
  %v233 = vadd.f32 %v40, %v203
  %v234 = vadd.f32 %v41, %v205
  %v235 = vadd.f32 %v42, %v208
  %v236 = vadd.f32 %v43, %v210
  %v237 = vadd.f32 %v44, %v213
  %v238 = vadd.f32 %v45, %v215
  %v239 = vadd.f32 %v46, %v218
  %v240 = vadd.f32 %v47, %v220
  %v241 = vadd.f32 %v48, %v223
  %v242 = vadd.f32 %v49, %v225
  %243 = vst [vmem:[#allocation2] sm:$0xff] %v227
  %244 = vst [vmem:[#allocation2 + $0x8] sm:$0xff] %v228
  %245 = vst [vmem:[#allocation2 + $0x10] sm:$0xff] %v229
  %246 = vst [vmem:[#allocation2 + $0x18] sm:$0xff] %v230
  %247 = vst [vmem:[#allocation2 + $0x20] sm:$0xff] %v231
  %248 = vst [vmem:[#allocation2 + $0x28] sm:$0xff] %v232
  %249 = vst [vmem:[#allocation2 + $0x30] sm:$0xff] %v233
  %250 = vst [vmem:[#allocation2 + $0x38] sm:$0xff] %v234
  %251 = vst [vmem:[#allocation2 + $0x40] sm:$0xff] %v235
  %252 = vst [vmem:[#allocation2 + $0x48] sm:$0xff] %v236
  %253 = vst [vmem:[#allocation2 + $0x50] sm:$0xff] %v237
  %254 = vst [vmem:[#allocation2 + $0x58] sm:$0xff] %v238
  %255 = vst [vmem:[#allocation2 + $0x60] sm:$0xff] %v239
  %256 = vst [vmem:[#allocation2 + $0x68] sm:$0xff] %v240
  %257 = vst [vmem:[#allocation2 + $0x70] sm:$0xff] %v241
  %258 = vst [vmem:[#allocation2 + $0x78] sm:$0xff] %v242
  // Predicated region
  $region18: #{hyper_region_cl_forward.6} parent=0 // pred_check
    %p259 = pneg %p14
  $region19: #{hyper_region_cl_forward.6} parent=0 // pred_check_branch
    %261 = sbr.rel (%p259) target = $region21
  $region20: #{hyper_region_cl_forward.6} parent=0 // pred_region
    %v262 = vld [vmem:[#allocation2] sm:$0xff]
    %v263 = vld [vmem:[#allocation2 + $0x8] sm:$0xff]
    %v264 = vld [vmem:[#allocation2 + $0x10] sm:$0xff]
    %v265 = vld [vmem:[#allocation2 + $0x18] sm:$0xff]
    %v266 = vld [vmem:[#allocation2 + $0x20] sm:$0xff]
    %v267 = vld [vmem:[#allocation2 + $0x28] sm:$0xff]
    %v268 = vld [vmem:[#allocation2 + $0x30] sm:$0xff]
    %v269 = vld [vmem:[#allocation2 + $0x38] sm:$0xff]
    %v270 = vld [vmem:[#allocation2 + $0x40] sm:$0xff]
    %v271 = vld [vmem:[#allocation2 + $0x48] sm:$0xff]
    %v272 = vld [vmem:[#allocation2 + $0x50] sm:$0xff]
    %v273 = vld [vmem:[#allocation2 + $0x58] sm:$0xff]
    %v274 = vld [vmem:[#allocation2 + $0x60] sm:$0xff]
    %v275 = vld [vmem:[#allocation2 + $0x68] sm:$0xff]
    %v276 = vld [vmem:[#allocation2 + $0x70] sm:$0xff]
    %v277 = vld [vmem:[#allocation2 + $0x78] sm:$0xff]
    %v278 = vld [vmem:[%s2] sm:$0x1]
    %v280 = vperm.slane %v278, 0
    %v282 = vadd.f32 %v262, %v280
    %v283 = vadd.f32 %v263, %v280
    %v284 = vadd.f32 %v264, %v280
    %v285 = vadd.f32 %v265, %v280
    %v286 = vadd.f32 %v266, %v280
    %v287 = vadd.f32 %v267, %v280
    %v288 = vadd.f32 %v268, %v280
    %v289 = vadd.f32 %v269, %v280
    %v290 = vadd.f32 %v270, %v280
    %v291 = vadd.f32 %v271, %v280
    %v292 = vadd.f32 %v272, %v280
    %v293 = vadd.f32 %v273, %v280
    %v294 = vadd.f32 %v274, %v280
    %v295 = vadd.f32 %v275, %v280
    %v296 = vadd.f32 %v276, %v280
    %v297 = vadd.f32 %v277, %v280
    %v298 = vmax.f32 %v282, 0.0
    %v299 = vmax.f32 %v283, 0.0
    %v300 = vmax.f32 %v284, 0.0
    %v301 = vmax.f32 %v285, 0.0
    %v302 = vmax.f32 %v286, 0.0
    %v303 = vmax.f32 %v287, 0.0
    %v304 = vmax.f32 %v288, 0.0
    %v305 = vmax.f32 %v289, 0.0
    %v306 = vmax.f32 %v290, 0.0
    %v307 = vmax.f32 %v291, 0.0
    %v308 = vmax.f32 %v292, 0.0
    %v309 = vmax.f32 %v293, 0.0
    %v310 = vmax.f32 %v294, 0.0
    %v311 = vmax.f32 %v295, 0.0
    %v312 = vmax.f32 %v296, 0.0
    %v313 = vmax.f32 %v297, 0.0
    %314 = vst [vmem:[%s3] sm:$0xff] %v298
    %315 = vst [vmem:[%s3 + $0x8] sm:$0xff] %v299
    %316 = vst [vmem:[%s3 + $0x10] sm:$0xff] %v300
    %317 = vst [vmem:[%s3 + $0x18] sm:$0xff] %v301
    %318 = vst [vmem:[%s3 + $0x20] sm:$0xff] %v302
    %319 = vst [vmem:[%s3 + $0x28] sm:$0xff] %v303
    %320 = vst [vmem:[%s3 + $0x30] sm:$0xff] %v304
    %321 = vst [vmem:[%s3 + $0x38] sm:$0xff] %v305
    %322 = vst [vmem:[%s3 + $0x40] sm:$0xff] %v306
    %323 = vst [vmem:[%s3 + $0x48] sm:$0xff] %v307
    %324 = vst [vmem:[%s3 + $0x50] sm:$0xff] %v308
    %325 = vst [vmem:[%s3 + $0x58] sm:$0xff] %v309
    %326 = vst [vmem:[%s3 + $0x60] sm:$0xff] %v310
    %327 = vst [vmem:[%s3 + $0x68] sm:$0xff] %v311
    %328 = vst [vmem:[%s3 + $0x70] sm:$0xff] %v312
    %329 = vst [vmem:[%s3 + $0x78] sm:$0xff] %v313
  $region21: #{hyper_region_cl_forward.6} parent=0 // pred_fallthru
    _
  // Predicated region
  $region22: #{hyper_region_cl_forward.6} parent=0 // pred_check
    _
  $region23: #{hyper_region_cl_forward.6} parent=0 // pred_check_branch
    %331 = sbr.rel (0) target = $region25
  $region24: #{hyper_region_cl_forward.6} parent=0 // pred_region
    _
  $region25: #{hyper_region_cl_forward.6} parent=0 // pred_fallthru
    _
  // Predicated region
  $region26: #{hyper_region_cl_forward.6} parent=0 // pred_check
    _
  $region27: #{hyper_region_cl_forward.6} parent=0 // pred_check_branch
    %333 = sbr.rel (0) target = $region29
  $region28: #{hyper_region_cl_forward.6} parent=0 // pred_region
    _
  $region29: #{hyper_region_cl_forward.6} parent=0 // pred_fallthru
    _

</llo_original>
